<compile_context>
chip_gen: v7x
topology: tpu7x:2x2x1
jax: 0.10.0
libtpu: 0.0.40
codegen_flags: <defaults>
</compile_context>

<pallas_src>
import jax
import jax.numpy as jnp
from jax.experimental import pallas as pl
from jax.experimental.pallas import tpu as pltpu

LANE = 128


def _round_up(v, m):
    return (v + m - 1) // m * m


def _fused_encoder_kernel(
    y0_ref, x_ref, y_ref,
    w1y0_ref, b1y0_ref, w2y0_ref, b2y0_ref,
    w1x_ref, w1y_ref, b1c_ref, w2c_ref, b2c_ref,
    l_ref, d_ref,
):
    """Fused y0-encoder + context-encoder MLP forward (all lane-dense)."""
    # --- context encoder on this row tile; concat folded into a split matmul ---
    h = (
        jnp.dot(x_ref[...], w1x_ref[...], preferred_element_type=jnp.float32)
        + jnp.dot(y_ref[...], w1y_ref[...], preferred_element_type=jnp.float32)
        + b1c_ref[...]
    )
    h = jnp.maximum(h, 0.0)
    d_ref[...] = (
        jnp.dot(h, w2c_ref[...], preferred_element_type=jnp.float32) + b2c_ref[...]
    ).astype(d_ref.dtype)

    # --- y0 encoder: its output block is resident across the row grid; write once ---
    @pl.when(pl.program_id(0) == 0)
    def _():
        h0 = (
            jnp.dot(y0_ref[...], w1y0_ref[...], preferred_element_type=jnp.float32)
            + b1y0_ref[...]
        )
        h0 = jnp.maximum(h0, 0.0)
        l_ref[...] = (
            jnp.dot(h0, w2y0_ref[...], preferred_element_type=jnp.float32)
            + b2y0_ref[...]
        ).astype(l_ref.dtype)


def y0_context_ndp_encoder(params, x, y, y0, *, row_tile=512):
    """Forward pass matching Y0ContextNDPEncoder.forward(x, y, y0)."""
    n, x_dim = x.shape
    y_dim = y.shape[1]
    batch = y0.shape[0]

    L_dim = params["L_dim"]
    D_dim = params["D_dim"]
    hidden_p = params["w1x"].shape[1]
    L_p = params["w2y0"].shape[1]
    D_p = params["w2c"].shape[1]

    # Row tiling over context points: single step at demo sizes, pipelined at scale.
    tile = min(row_tile, _round_up(n, 8))
    n_pad = _round_up(n, tile)
    if n_pad != n:
        x = jnp.pad(x, ((0, n_pad - n), (0, 0)))
        y = jnp.pad(y, ((0, n_pad - n), (0, 0)))
    grid = (n_pad // tile,)

    def whole(shape):
        # Whole-array block, constant index map -> stays VMEM-resident across the grid.
        return pl.BlockSpec(shape, lambda i: (0, 0))

    weight_keys = ("w1y0", "b1y0", "w2y0", "b2y0", "w1x", "w1y", "b1c", "w2c", "b2c")
    flops = (
        2 * batch * hidden_p * (y_dim + L_p)
        + 2 * n_pad * hidden_p * (x_dim + y_dim + D_p)
    )
    bytes_accessed = 4 * (
        y0.size + x.size + y.size
        + sum(int(params[k].size) for k in weight_keys)
        + batch * L_p + n_pad * D_p
    )

    l_pad, d_pad = pl.pallas_call(
        _fused_encoder_kernel,
        out_shape=(
            jax.ShapeDtypeStruct((batch, L_p), jnp.float32),
            jax.ShapeDtypeStruct((n_pad, D_p), jnp.float32),
        ),
        grid_spec=pltpu.PrefetchScalarGridSpec(
            num_scalar_prefetch=0,
            grid=grid,
            in_specs=[
                whole((batch, y_dim)),                          # y0 (resident)
                pl.BlockSpec((tile, x_dim), lambda i: (i, 0)),  # x row tile
                pl.BlockSpec((tile, y_dim), lambda i: (i, 0)),  # y row tile
                whole(params["w1y0"].shape),
                whole(params["b1y0"].shape),
                whole(params["w2y0"].shape),
                whole(params["b2y0"].shape),
                whole(params["w1x"].shape),
                whole(params["w1y"].shape),
                whole(params["b1c"].shape),
                whole(params["w2c"].shape),
                whole(params["b2c"].shape),
            ],
            out_specs=(
                pl.BlockSpec((batch, L_p), lambda i: (0, 0)),   # L (resident)
                pl.BlockSpec((tile, D_p), lambda i: (i, 0)),    # D row tile
            ),
        ),
        compiler_params=pltpu.CompilerParams(
            # The L output block is revisited across the row axis (written once at
            # step 0), so this axis must stay sequential rather than megacore-parallel.
            dimension_semantics=("arbitrary",),
        ),
        cost_estimate=pl.CostEstimate(
            flops=flops, transcendentals=0, bytes_accessed=bytes_accessed
        ),
    )(
        y0, x, y,
        params["w1y0"], params["b1y0"], params["w2y0"], params["b2y0"],
        params["w1x"], params["w1y"], params["b1c"], params["w2c"], params["b2c"],
    )

    # Slice off the zero lane padding to recover the module's true output widths.
    return l_pad[:, :L_dim], d_pad[:n, :D_dim]


def init_linear(key, in_dim, out_dim):
    """Deterministic nn.Linear-style init; weight stored transposed as (in, out)."""
    kw, kb = jax.random.split(key)
    bound = float(in_dim) ** -0.5
    w = jax.random.uniform(kw, (in_dim, out_dim), jnp.float32, -bound, bound)
    b = jax.random.uniform(kb, (1, out_dim), jnp.float32, -bound, bound)
    return w, b


def _pad2(a, rows, cols):
    return jnp.pad(a, ((0, rows - a.shape[0]), (0, cols - a.shape[1])))


def make_params(key, x_dim, y_dim, hidden, L_dim, D_dim):
    """Build unpadded reference params and lane-padded / concat-split kernel params."""
    k1, k2, k3, k4 = jax.random.split(key, 4)
    w1_y0, b1_y0 = init_linear(k1, y_dim, hidden)
    w2_y0, b2_y0 = init_linear(k2, hidden, L_dim)
    w1_c, b1_c = init_linear(k3, x_dim + y_dim, hidden)
    w2_c, b2_c = init_linear(k4, hidden, D_dim)
    ref = {
        "y0_encoder": (w1_y0, b1_y0, w2_y0, b2_y0),
        "context_encoder": (w1_c, b1_c, w2_c, b2_c),
    }

    # One-time host-side padding to lane-dense (multiples of 128) shapes; exactness
    # preserved since padded hidden units have zero weight and bias.  The context
    # W1 is split by input rows so the concat([x, y]) happens inside the kernel.
    hp = _round_up(hidden, LANE)
    Lp = _round_up(L_dim, LANE)
    Dp = _round_up(D_dim, LANE)
    kern = {
        "L_dim": L_dim,
        "D_dim": D_dim,
        "w1y0": _pad2(w1_y0, y_dim, hp),
        "b1y0": _pad2(b1_y0, 1, hp),
        "w2y0": _pad2(w2_y0, hp, Lp),
        "b2y0": _pad2(b2_y0, 1, Lp),
        "w1x": _pad2(w1_c[:x_dim], x_dim, hp),
        "w1y": _pad2(w1_c[x_dim:], y_dim, hp),
        "b1c": _pad2(b1_c, 1, hp),
        "w2c": _pad2(w2_c, hp, Dp),
        "b2c": _pad2(b2_c, 1, Dp),
    }
    return ref, kern


if __name__ == "__main__":
    batch_size = 2
    num_points = 8
    x_dim = 2
    y_dim = 4
    hidden = 32
    L_dim = 16   # y0_encoder output (L(0) representation)
    D_dim = 16   # context_encoder output (D representation)

    key = jax.random.PRNGKey(0)
    k_x, k_y, k_y0, k_p = jax.random.split(key, 4)

    x = jax.random.normal(k_x, (batch_size * num_points, x_dim), jnp.float32)
    y = jax.random.normal(k_y, (batch_size * num_points, y_dim), jnp.float32)
    y0 = jax.random.normal(k_y0, (batch_size, y_dim), jnp.float32)

    ref_params, kern_params = make_params(k_p, x_dim, y_dim, hidden, L_dim, D_dim)

    L_out, D_out = y0_context_ndp_encoder(kern_params, x, y, y0)
    jax.block_until_ready((L_out, D_out))

    # Pure-JAX reference check (against the unpadded nn.Linear-style params).
    def ref_mlp(inp, w1, b1, w2, b2):
        return jnp.maximum(inp @ w1 + b1, 0.0) @ w2 + b2

    L_ref = ref_mlp(y0, *ref_params["y0_encoder"])
    D_ref = ref_mlp(jnp.concatenate([x, y], axis=-1), *ref_params["context_encoder"])
    assert L_out.shape == (batch_size, L_dim)
    assert D_out.shape == (batch_size * num_points, D_dim)
    assert jnp.allclose(L_out, L_ref, atol=1e-5), "y0_encoder mismatch"
    assert jnp.allclose(D_out, D_ref, atol=1e-5), "context_encoder mismatch"

    print("KERNEL_OK")
</pallas_src>

<mosaic_0001>
module attributes {stable_mosaic.version = 11 : i64} {
  func.func @_fused_encoder_kernel(%arg0: i32, %arg1: memref<2x4xf32, #tpu.memory_space<vmem>>, %arg2: memref<16x2xf32, #tpu.memory_space<vmem>>, %arg3: memref<16x4xf32, #tpu.memory_space<vmem>>, %arg4: memref<4x128xf32, #tpu.memory_space<vmem>>, %arg5: memref<1x128xf32, #tpu.memory_space<vmem>>, %arg6: memref<128x128xf32, #tpu.memory_space<vmem>>, %arg7: memref<1x128xf32, #tpu.memory_space<vmem>>, %arg8: memref<2x128xf32, #tpu.memory_space<vmem>>, %arg9: memref<4x128xf32, #tpu.memory_space<vmem>>, %arg10: memref<1x128xf32, #tpu.memory_space<vmem>>, %arg11: memref<128x128xf32, #tpu.memory_space<vmem>>, %arg12: memref<1x128xf32, #tpu.memory_space<vmem>>, %arg13: memref<2x128xf32, #tpu.memory_space<vmem>>, %arg14: memref<16x128xf32, #tpu.memory_space<vmem>>) attributes {dimension_semantics = [#tpu.dimension_semantics<arbitrary>], iteration_bounds = array<i64: 1>, scalar_prefetch = 0 : i64, scratch_operands = 0 : i64, tpu.core_type = #tpu.core_type<tc>, window_params = [{pipeline_mode = #tpu.pipeline_mode<synchronous>, transform_indices = @transform_0, window_bounds = array<i64: 2, 4>}, {transform_indices = @transform_1, window_bounds = array<i64: 16, 2>}, {transform_indices = @transform_2, window_bounds = array<i64: 16, 4>}, {pipeline_mode = #tpu.pipeline_mode<synchronous>, transform_indices = @transform_3, window_bounds = array<i64: 4, 128>}, {pipeline_mode = #tpu.pipeline_mode<synchronous>, transform_indices = @transform_4, window_bounds = array<i64: 1, 128>}, {pipeline_mode = #tpu.pipeline_mode<synchronous>, transform_indices = @transform_5, window_bounds = array<i64: 128, 128>}, {pipeline_mode = #tpu.pipeline_mode<synchronous>, transform_indices = @transform_6, window_bounds = array<i64: 1, 128>}, {pipeline_mode = #tpu.pipeline_mode<synchronous>, transform_indices = @transform_7, window_bounds = array<i64: 2, 128>}, {pipeline_mode = #tpu.pipeline_mode<synchronous>, transform_indices = @transform_8, window_bounds = array<i64: 4, 128>}, {pipeline_mode = #tpu.pipeline_mode<synchronous>, transform_indices = @transform_9, window_bounds = array<i64: 1, 128>}, {pipeline_mode = #tpu.pipeline_mode<synchronous>, transform_indices = @transform_10, window_bounds = array<i64: 128, 128>}, {pipeline_mode = #tpu.pipeline_mode<synchronous>, transform_indices = @transform_11, window_bounds = array<i64: 1, 128>}, {pipeline_mode = #tpu.pipeline_mode<synchronous>, transform_indices = @transform_12, window_bounds = array<i64: 2, 128>}, {transform_indices = @transform_13, window_bounds = array<i64: 16, 128>}]} {
    %c0 = arith.constant 0 : index
    %c0_0 = arith.constant 0 : index
    %0 = vector.load %arg2[%c0, %c0_0] : memref<16x2xf32, #tpu.memory_space<vmem>>, vector<16x2xf32>
    %c0_1 = arith.constant 0 : index
    %c0_2 = arith.constant 0 : index
    %1 = vector.load %arg8[%c0_1, %c0_2] : memref<2x128xf32, #tpu.memory_space<vmem>>, vector<2x128xf32>
    %cst = arith.constant dense<0.000000e+00> : vector<16x128xf32>
    %2 = tpu.matmul %0, %1, %cst {dimension_numbers = #tpu.dot_dimension_numbers<[1], [0], [0], [1], [0, 0, 1, 1], [], []>} : vector<16x2xf32>, vector<2x128xf32>, vector<16x128xf32> -> vector<16x128xf32>
    %c0_3 = arith.constant 0 : index
    %c0_4 = arith.constant 0 : index
    %3 = vector.load %arg3[%c0_3, %c0_4] : memref<16x4xf32, #tpu.memory_space<vmem>>, vector<16x4xf32>
    %c0_5 = arith.constant 0 : index
    %c0_6 = arith.constant 0 : index
    %4 = vector.load %arg9[%c0_5, %c0_6] : memref<4x128xf32, #tpu.memory_space<vmem>>, vector<4x128xf32>
    %cst_7 = arith.constant dense<0.000000e+00> : vector<16x128xf32>
    %5 = tpu.matmul %3, %4, %cst_7 {dimension_numbers = #tpu.dot_dimension_numbers<[1], [0], [0], [1], [0, 0, 1, 1], [], []>} : vector<16x4xf32>, vector<4x128xf32>, vector<16x128xf32> -> vector<16x128xf32>
    %6 = arith.addf %2, %5 : vector<16x128xf32>
    %c0_8 = arith.constant 0 : index
    %c0_9 = arith.constant 0 : index
    %7 = vector.load %arg10[%c0_8, %c0_9] : memref<1x128xf32, #tpu.memory_space<vmem>>, vector<1x128xf32>
    %8 = vector.broadcast %7 : vector<1x128xf32> to vector<16x128xf32>
    %9 = arith.addf %6, %8 : vector<16x128xf32>
    %cst_10 = arith.constant 0.000000e+00 : f32
    %10 = vector.broadcast %cst_10 : f32 to vector<16x128xf32>
    %11 = arith.maximumf %9, %10 : vector<16x128xf32>
    %c0_11 = arith.constant 0 : index
    %c0_12 = arith.constant 0 : index
    %12 = vector.load %arg11[%c0_11, %c0_12] : memref<128x128xf32, #tpu.memory_space<vmem>>, vector<128x128xf32>
    %cst_13 = arith.constant dense<0.000000e+00> : vector<16x128xf32>
    %13 = tpu.matmul %11, %12, %cst_13 {dimension_numbers = #tpu.dot_dimension_numbers<[1], [0], [0], [1], [0, 0, 1, 1], [], []>} : vector<16x128xf32>, vector<128x128xf32>, vector<16x128xf32> -> vector<16x128xf32>
    %c0_14 = arith.constant 0 : index
    %c0_15 = arith.constant 0 : index
    %14 = vector.load %arg12[%c0_14, %c0_15] : memref<1x128xf32, #tpu.memory_space<vmem>>, vector<1x128xf32>
    %15 = vector.broadcast %14 : vector<1x128xf32> to vector<16x128xf32>
    %16 = arith.addf %13, %15 : vector<16x128xf32>
    %c0_16 = arith.constant 0 : index
    %c0_17 = arith.constant 0 : index
    %17 = vector.load %arg14[%c0_16, %c0_17] : memref<16x128xf32, #tpu.memory_space<vmem>>, vector<16x128xf32>
    tpu.vector_store %arg14[%c0_16, %c0_17], %16 {strides = array<i32>} : memref<16x128xf32, #tpu.memory_space<vmem>>, vector<16x128xf32>,
    %c0_i32 = arith.constant 0 : i32
    %18 = arith.cmpi eq, %arg0, %c0_i32 : i32
    %19 = arith.extui %18 : i1 to i32
    %c0_i32_18 = arith.constant 0 : i32
    %20 = arith.cmpi ne, %19, %c0_i32_18 : i32
    scf.if %20 {
      %c0_19 = arith.constant 0 : index
      %c0_20 = arith.constant 0 : index
      %21 = vector.load %arg1[%c0_19, %c0_20] : memref<2x4xf32, #tpu.memory_space<vmem>>, vector<2x4xf32>
      %c0_21 = arith.constant 0 : index
      %c0_22 = arith.constant 0 : index
      %22 = vector.load %arg4[%c0_21, %c0_22] : memref<4x128xf32, #tpu.memory_space<vmem>>, vector<4x128xf32>
      %cst_23 = arith.constant dense<0.000000e+00> : vector<2x128xf32>
      %23 = tpu.matmul %21, %22, %cst_23 {dimension_numbers = #tpu.dot_dimension_numbers<[1], [0], [0], [1], [0, 0, 1, 1], [], []>} : vector<2x4xf32>, vector<4x128xf32>, vector<2x128xf32> -> vector<2x128xf32>
      %c0_24 = arith.constant 0 : index
      %c0_25 = arith.constant 0 : index
      %24 = vector.load %arg5[%c0_24, %c0_25] : memref<1x128xf32, #tpu.memory_space<vmem>>, vector<1x128xf32>
      %25 = vector.broadcast %24 : vector<1x128xf32> to vector<2x128xf32>
      %26 = arith.addf %23, %25 : vector<2x128xf32>
      %cst_26 = arith.constant 0.000000e+00 : f32
      %27 = vector.broadcast %cst_26 : f32 to vector<2x128xf32>
      %28 = arith.maximumf %26, %27 : vector<2x128xf32>
      %c0_27 = arith.constant 0 : index
      %c0_28 = arith.constant 0 : index
      %29 = vector.load %arg6[%c0_27, %c0_28] : memref<128x128xf32, #tpu.memory_space<vmem>>, vector<128x128xf32>
      %cst_29 = arith.constant dense<0.000000e+00> : vector<2x128xf32>
      %30 = tpu.matmul %28, %29, %cst_29 {dimension_numbers = #tpu.dot_dimension_numbers<[1], [0], [0], [1], [0, 0, 1, 1], [], []>} : vector<2x128xf32>, vector<128x128xf32>, vector<2x128xf32> -> vector<2x128xf32>
      %c0_30 = arith.constant 0 : index
      %c0_31 = arith.constant 0 : index
      %31 = vector.load %arg7[%c0_30, %c0_31] : memref<1x128xf32, #tpu.memory_space<vmem>>, vector<1x128xf32>
      %32 = vector.broadcast %31 : vector<1x128xf32> to vector<2x128xf32>
      %33 = arith.addf %30, %32 : vector<2x128xf32>
      %c0_32 = arith.constant 0 : index
      %c0_33 = arith.constant 0 : index
      %34 = vector.load %arg13[%c0_32, %c0_33] : memref<2x128xf32, #tpu.memory_space<vmem>>, vector<2x128xf32>
      tpu.vector_store %arg13[%c0_32, %c0_33], %33 {strides = array<i32>} : memref<2x128xf32, #tpu.memory_space<vmem>>, vector<2x128xf32>,
    } else {
    }
    return
  }
  func.func @transform_0(%arg0: i32) -> (i32, i32) {
    %c0_i32 = arith.constant 0 : i32
    %c0_i32_0 = arith.constant 0 : i32
    %c0_i32_1 = arith.constant 0 : i32
    return %c0_i32, %c0_i32_0 : i32, i32
  }
  func.func @transform_1(%arg0: i32) -> (i32, i32) {
    %c0_i32 = arith.constant 0 : i32
    %c0_i32_0 = arith.constant 0 : i32
    return %arg0, %c0_i32 : i32, i32
  }
  func.func @transform_2(%arg0: i32) -> (i32, i32) {
    %c0_i32 = arith.constant 0 : i32
    %c0_i32_0 = arith.constant 0 : i32
    return %arg0, %c0_i32 : i32, i32
  }
  func.func @transform_3(%arg0: i32) -> (i32, i32) {
    %c0_i32 = arith.constant 0 : i32
    %c0_i32_0 = arith.constant 0 : i32
    %c0_i32_1 = arith.constant 0 : i32
    return %c0_i32, %c0_i32_0 : i32, i32
  }
  func.func @transform_4(%arg0: i32) -> (i32, i32) {
    %c0_i32 = arith.constant 0 : i32
    %c0_i32_0 = arith.constant 0 : i32
    %c0_i32_1 = arith.constant 0 : i32
    return %c0_i32, %c0_i32_0 : i32, i32
  }
  func.func @transform_5(%arg0: i32) -> (i32, i32) {
    %c0_i32 = arith.constant 0 : i32
    %c0_i32_0 = arith.constant 0 : i32
    %c0_i32_1 = arith.constant 0 : i32
    return %c0_i32, %c0_i32_0 : i32, i32
  }
  func.func @transform_6(%arg0: i32) -> (i32, i32) {
    %c0_i32 = arith.constant 0 : i32
    %c0_i32_0 = arith.constant 0 : i32
    %c0_i32_1 = arith.constant 0 : i32
    return %c0_i32, %c0_i32_0 : i32, i32
  }
  func.func @transform_7(%arg0: i32) -> (i32, i32) {
    %c0_i32 = arith.constant 0 : i32
    %c0_i32_0 = arith.constant 0 : i32
    %c0_i32_1 = arith.constant 0 : i32
    return %c0_i32, %c0_i32_0 : i32, i32
  }
  func.func @transform_8(%arg0: i32) -> (i32, i32) {
    %c0_i32 = arith.constant 0 : i32
    %c0_i32_0 = arith.constant 0 : i32
    %c0_i32_1 = arith.constant 0 : i32
    return %c0_i32, %c0_i32_0 : i32, i32
  }
  func.func @transform_9(%arg0: i32) -> (i32, i32) {
    %c0_i32 = arith.constant 0 : i32
    %c0_i32_0 = arith.constant 0 : i32
    %c0_i32_1 = arith.constant 0 : i32
    return %c0_i32, %c0_i32_0 : i32, i32
  }
  func.func @transform_10(%arg0: i32) -> (i32, i32) {
    %c0_i32 = arith.constant 0 : i32
    %c0_i32_0 = arith.constant 0 : i32
    %c0_i32_1 = arith.constant 0 : i32
    return %c0_i32, %c0_i32_0 : i32, i32
  }
  func.func @transform_11(%arg0: i32) -> (i32, i32) {
    %c0_i32 = arith.constant 0 : i32
    %c0_i32_0 = arith.constant 0 : i32
    %c0_i32_1 = arith.constant 0 : i32
    return %c0_i32, %c0_i32_0 : i32, i32
  }
  func.func @transform_12(%arg0: i32) -> (i32, i32) {
    %c0_i32 = arith.constant 0 : i32
    %c0_i32_0 = arith.constant 0 : i32
    %c0_i32_1 = arith.constant 0 : i32
    return %c0_i32, %c0_i32_0 : i32, i32
  }
  func.func @transform_13(%arg0: i32) -> (i32, i32) {
    %c0_i32 = arith.constant 0 : i32
    %c0_i32_0 = arith.constant 0 : i32
    return %arg0, %c0_i32 : i32, i32
  }
}

</mosaic_0001>

<llo_original>
// kernel: tpu_custom_call.1
$region0: #{tpu_custom_call.1}
  #allocation0 [shape = 'u32[]', space=smem, size = 0x4, offset = 0x4, fixed_abs, tag = 'smem constant byte address 0x4 - core index']
  #allocation1 [shape = 'u32[144,128]{1,0:T(1,128)}', space=vmem, size = 0x12000, scoped, tag = 'internal scratch']
  %s0 = inlined_call_operand.vmem [shape: f32[2,4], index: 0, kind: input, shape index: {}]
  %s1 = inlined_call_operand.vmem [shape: f32[16,2], index: 1, kind: input, shape index: {}]
  %s2 = inlined_call_operand.vmem [shape: f32[16,4], index: 2, kind: input, shape index: {}]
  %s3 = inlined_call_operand.vmem [shape: f32[4,128], index: 3, kind: input, shape index: {}]
  %s4 = inlined_call_operand.vmem [shape: f32[1,128], index: 4, kind: input, shape index: {}]
  %s5 = inlined_call_operand.hbm [shape: f32[128,128], index: 5, kind: input, shape index: {}]
  %s6 = inlined_call_operand.vmem [shape: f32[1,128], index: 6, kind: input, shape index: {}]
  %s7 = inlined_call_operand.vmem [shape: f32[2,128], index: 7, kind: input, shape index: {}]
  %s8 = inlined_call_operand.vmem [shape: f32[4,128], index: 8, kind: input, shape index: {}]
  %s9 = inlined_call_operand.vmem [shape: f32[1,128], index: 9, kind: input, shape index: {}]
  %s10 = inlined_call_operand.hbm [shape: f32[128,128], index: 10, kind: input, shape index: {}]
  %s11 = inlined_call_operand.vmem [shape: f32[1,128], index: 11, kind: input, shape index: {}]
  %s12 = inlined_call_operand.hbm [shape: f32[2,128], index: 12, kind: output, shape index: {0}]
  %s13 = inlined_call_operand.hbm [shape: f32[16,128], index: 13, kind: output, shape index: {1}]
  %14 = xla_tuple %s12, %s13
  %s15 = sld [smem:[#allocation0]]
  $region78: #{tpu_custom_call.1} parent=0
    _
  %s17 = ssub.s32 1, %s15
  %s18 = scalar_select 0, %s17, %s15
  $region1: #{tpu_custom_call.1} parent=0
    #allocation2 [shape = 'u8[65536]{0}', space=vmem, size = 0x10000, scoped, tag = 'input window, operand 5, single buffered']
    #allocation3 [shape = 's32[1]{0}', space=sflag, size = 0x4, scoped, tag = 'scoped memory for tpu_custom_call.1']
    #allocation4 [shape = 's32[1]{0}', space=sflag, size = 0x4, scoped, tag = 'scoped memory for tpu_custom_call.1']
    #allocation5 [shape = 'u8[65536]{0}', space=vmem, size = 0x10000, scoped, tag = 'input window, operand 10, single buffered']
    #allocation6 [shape = 's32[1]{0}', space=sflag, size = 0x4, scoped, tag = 'scoped memory for tpu_custom_call.1']
    #allocation7 [shape = 'u8[1024]{0}', space=vmem, size = 0x400, scoped, tag = 'output window, operand 0, single buffered']
    #allocation8 [shape = 'u8[8192]{0}', space=vmem, size = 0x2000, scoped, tag = 'output window, operand 1, single buffered']
    #allocation9 [shape = 's32[1]{0}', space=sflag, size = 0x4, scoped, tag = 'scoped memory for tpu_custom_call.1']
    %19 = vsyncpa [#allocation3], 0
    %20 = vsyncpa [#allocation6], 0
    %21 = vsyncpa [#allocation4], 0
    %22 = vsyncpa [#allocation9], 0
    // Predicated region
    $region2: #{tpu_custom_call.1} parent=1 // pred_check
      _
    $region3: #{tpu_custom_call.1} parent=1 // pred_check_branch
      %24 = sbr.rel (0) target = $region5
    $region4: #{tpu_custom_call.1} parent=1 // pred_region
      _
    $region5: #{tpu_custom_call.1} parent=1 // pred_fallthru
      _
    // Predicated region
    $region6: #{tpu_custom_call.1} parent=1 // pred_check
      _
    $region7: #{tpu_custom_call.1} parent=1 // pred_check_branch
      %26 = sbr.rel (0) target = $region9
    $region8: #{tpu_custom_call.1} parent=1 // pred_region
      _
    $region9: #{tpu_custom_call.1} parent=1 // pred_fallthru
      _
    // Predicated region
    $region10: #{tpu_custom_call.1} parent=1 // pred_check
      _
    $region11: #{tpu_custom_call.1} parent=1 // pred_check_branch
      %28 = sbr.rel (0) target = $region13
    $region12: #{tpu_custom_call.1} parent=1 // pred_region
      _
    $region13: #{tpu_custom_call.1} parent=1 // pred_fallthru
      _
    // Predicated region
    $region14: #{tpu_custom_call.1} parent=1 // pred_check
      _
    $region15: #{tpu_custom_call.1} parent=1 // pred_check_branch
      %30 = sbr.rel (0) target = $region17
    $region16: #{tpu_custom_call.1} parent=1 // pred_region
      _
    $region17: #{tpu_custom_call.1} parent=1 // pred_fallthru
      _
    // Predicated region
    $region18: #{tpu_custom_call.1} parent=1 // pred_check
      _
    $region19: #{tpu_custom_call.1} parent=1 // pred_check_branch
      %32 = sbr.rel (0) target = $region21
    $region20: #{tpu_custom_call.1} parent=1 // pred_region
      _
    $region21: #{tpu_custom_call.1} parent=1 // pred_fallthru
      _
    // Predicated region
    $region22: #{tpu_custom_call.1} parent=1 // pred_check
      _
    $region23: #{tpu_custom_call.1} parent=1 // pred_check_branch
      %34 = sbr.rel (0) target = $region25
    $region24: #{tpu_custom_call.1} parent=1 // pred_region
      %s36 = ssub.s32 2048, 2048
      %37 = vsyncadd [#allocation3], %s36
      %s38 = sshll.u32 [#allocation2], 4
      %s39 = int_to_ptr.vmem [resolvable:$true] %s38
      %44 = dma.hbm_to_vmem [thread:$0]  %s5, 2048, %s39, [#allocation3], 128, 128, 8
    $region25: #{tpu_custom_call.1} parent=1 // pred_fallthru
      _
    // Predicated region
    $region26: #{tpu_custom_call.1} parent=1 // pred_check
      _
    $region27: #{tpu_custom_call.1} parent=1 // pred_check_branch
      %46 = sbr.rel (0) target = $region29
    $region28: #{tpu_custom_call.1} parent=1 // pred_region
      _
    $region29: #{tpu_custom_call.1} parent=1 // pred_fallthru
      _
    // Predicated region
    $region30: #{tpu_custom_call.1} parent=1 // pred_check
      _
    $region31: #{tpu_custom_call.1} parent=1 // pred_check_branch
      %48 = sbr.rel (0) target = $region33
    $region32: #{tpu_custom_call.1} parent=1 // pred_region
      _
    $region33: #{tpu_custom_call.1} parent=1 // pred_fallthru
      _
    // Predicated region
    $region34: #{tpu_custom_call.1} parent=1 // pred_check
      _
    $region35: #{tpu_custom_call.1} parent=1 // pred_check_branch
      %50 = sbr.rel (0) target = $region37
    $region36: #{tpu_custom_call.1} parent=1 // pred_region
      _
    $region37: #{tpu_custom_call.1} parent=1 // pred_fallthru
      _
    // Predicated region
    $region38: #{tpu_custom_call.1} parent=1 // pred_check
      _
    $region39: #{tpu_custom_call.1} parent=1 // pred_check_branch
      %52 = sbr.rel (0) target = $region41
    $region40: #{tpu_custom_call.1} parent=1 // pred_region
      _
    $region41: #{tpu_custom_call.1} parent=1 // pred_fallthru
      _
    // Predicated region
    $region42: #{tpu_custom_call.1} parent=1 // pred_check
      _
    $region43: #{tpu_custom_call.1} parent=1 // pred_check_branch
      %54 = sbr.rel (0) target = $region45
    $region44: #{tpu_custom_call.1} parent=1 // pred_region
      %s56 = ssub.s32 2048, 2048
      %57 = vsyncadd [#allocation6], %s56
      %s58 = sshll.u32 [#allocation5], 4
      %s59 = int_to_ptr.vmem [resolvable:$true] %s58
      %64 = dma.hbm_to_vmem [thread:$0]  %s10, 2048, %s59, [#allocation6], 128, 128, 8
    $region45: #{tpu_custom_call.1} parent=1 // pred_fallthru
      _
    // Predicated region
    $region46: #{tpu_custom_call.1} parent=1 // pred_check
      _
    $region47: #{tpu_custom_call.1} parent=1 // pred_check_branch
      %66 = sbr.rel (0) target = $region49
    $region48: #{tpu_custom_call.1} parent=1 // pred_region
      _
    $region49: #{tpu_custom_call.1} parent=1 // pred_fallthru
      _
    // Predicated region
    $region50: #{tpu_custom_call.1} parent=1 // pred_check
      _
    $region51: #{tpu_custom_call.1} parent=1 // pred_check_branch
      %68 = sbr.rel (0) target = $region53
    $region52: #{tpu_custom_call.1} parent=1 // pred_region
      %69 = dma.done [#allocation3], 2048
    $region53: #{tpu_custom_call.1} parent=1 // pred_fallthru
      _
    // Predicated region
    $region54: #{tpu_custom_call.1} parent=1 // pred_check
      _
    $region55: #{tpu_custom_call.1} parent=1 // pred_check_branch
      %71 = sbr.rel (0) target = $region57
    $region56: #{tpu_custom_call.1} parent=1 // pred_region
      %72 = dma.done [#allocation6], 2048
    $region57: #{tpu_custom_call.1} parent=1 // pred_fallthru
      _
    %v73 = vld [vmem:[%s1] sm:$0xff]
    %v74 = vld [vmem:[%s1 + $0x8] sm:$0xff]
    %v75 = vld [vmem:[%s7] sm:$0x3]
    %v76 = vld [vmem:[%s2] sm:$0xff]
    %v77 = vld [vmem:[%s2 + $0x8] sm:$0xff]
    %v78 = vld [vmem:[%s8] sm:$0xf]
    %vm79 = vcmask 31744
    %v81 = vsel %vm79, %v76, 0
    %v84 = vsel %vm79, %v77, 0
    %vm86 = vcmask 1043456
    %v88 = vsel %vm86, %v78, 0
    %90 = vmatprep.subr.mxu0 0.0
    %91 = vmatpush1.msra.mxu0 %v88
    %92 = vmatprep.subr.mxu0 0.0
    %93 = vmatpush1.msra.mxu0 0.0
    %94 = vmatprep.subr.mxu0 0.0
    %95 = vmatpush1.msra.mxu0 0.0
    %96 = vmatprep.subr.mxu0 0.0
    %97 = vmatpush1.msra.mxu0 0.0
    %98 = vmatprep.subr.mxu0 0.0
    %99 = vmatpush1.msra.mxu0 0.0
    %100 = vmatprep.subr.mxu0 0.0
    %101 = vmatpush1.msra.mxu0 0.0
    %102 = vmatprep.subr.mxu0 0.0
    %103 = vmatpush1.msra.mxu0 0.0
    %104 = vmatprep.subr.mxu0 0.0
    %105 = vmatpush1.msra.mxu0 0.0
    %106 = vmatprep.subr.mxu0 0.0
    %107 = vmatpush1.msra.mxu0 0.0
    %108 = vmatprep.subr.mxu0 0.0
    %109 = vmatpush1.msra.mxu0 0.0
    %110 = vmatprep.subr.mxu0 0.0
    %111 = vmatpush1.msra.mxu0 0.0
    %112 = vmatprep.subr.mxu0 0.0
    %113 = vmatpush1.msra.mxu0 0.0
    %114 = vmatprep.subr.mxu0 0.0
    %115 = vmatpush1.msra.mxu0 0.0
    %116 = vmatprep.subr.mxu0 0.0
    %117 = vmatpush1.msra.mxu0 0.0
    %118 = vmatprep.subr.mxu0 0.0
    %119 = vmatpush1.msra.mxu0 0.0
    %120 = vmatprep.subr.mxu0 0.0
    %121 = vmatpush1.msra.mxu0 0.0
    %122 = vmatprep.subr.mxu0 0.0
    %123 = vmatpush1.msra.mxu0 0.0
    %124 = vmatprep.subr.mxu0 0.0
    %125 = vmatpush1.msra.mxu0 0.0
    %126 = vmatprep.subr.mxu0 0.0
    %127 = vmatpush1.msra.mxu0 0.0
    %128 = vmatprep.subr.mxu0 0.0
    %129 = vmatpush1.msra.mxu0 0.0
    %130 = vmatprep.subr.mxu0 0.0
    %131 = vmatpush1.msra.mxu0 0.0
    %132 = vmatprep.subr.mxu0 0.0
    %133 = vmatpush1.msra.mxu0 0.0
    %134 = vmatprep.subr.mxu0 0.0
    %135 = vmatpush1.msra.mxu0 0.0
    %136 = vmatprep.subr.mxu0 0.0
    %137 = vmatpush1.msra.mxu0 0.0
    %138 = vmatprep.subr.mxu0 0.0
    %139 = vmatpush1.msra.mxu0 0.0
    %140 = vmatprep.subr.mxu0 0.0
    %141 = vmatpush1.msra.mxu0 0.0
    %142 = vmatprep.subr.mxu0 0.0
    %143 = vmatpush1.msra.mxu0 0.0
    %144 = vmatprep.subr.mxu0 0.0
    %145 = vmatpush1.msra.mxu0 0.0
    %146 = vmatprep.subr.mxu0 0.0
    %147 = vmatpush1.msra.mxu0 0.0
    %148 = vmatprep.subr.mxu0 0.0
    %149 = vmatpush1.msra.mxu0 0.0
    %150 = vmatprep.subr.mxu0 0.0
    %151 = vmatpush1.msra.mxu0 0.0
    %152 = vmatprep.subr.mxu0 0.0
    %153 = vmatpush1.msra.mxu0 0.0
    %154 = vmatprep.mubr.f32.mxu0 0.0
    %155 = vmatmul.mubr.f32.gmra.mrb[0].mxu0 %v81
    %v156 = vpop.f32.mrb[0].mxu0
    %v157 = vadd.f32 0.0, %v156
    %v158 = vpop.f32.mrb[0].mxu0
    %159 = vmatprep.mubr.f32.mxu0 0.0
    %160 = vmatmul.mubr.f32.gmra.mrb[0].mxu0 %v84
    %v161 = vpop.f32.mrb[0].mxu0
    %v162 = vadd.f32 0.0, %v161
    %v163 = vpop.f32.mrb[0].mxu0
    %164 = vdwg.mxu0
    %vm165 = vcmask 15360
    %v167 = vsel %vm165, %v73, 0
    %v170 = vsel %vm165, %v74, 0
    %vm172 = vcmask 1041408
    %v174 = vsel %vm172, %v75, 0
    %176 = vmatprep.subr.mxu0 0.0
    %177 = vmatpush1.msra.mxu0 %v174
    %178 = vmatprep.subr.mxu0 0.0
    %179 = vmatpush1.msra.mxu0 0.0
    %180 = vmatprep.subr.mxu0 0.0
    %181 = vmatpush1.msra.mxu0 0.0
    %182 = vmatprep.subr.mxu0 0.0
    %183 = vmatpush1.msra.mxu0 0.0
    %184 = vmatprep.subr.mxu0 0.0
    %185 = vmatpush1.msra.mxu0 0.0
    %186 = vmatprep.subr.mxu0 0.0
    %187 = vmatpush1.msra.mxu0 0.0
    %188 = vmatprep.subr.mxu0 0.0
    %189 = vmatpush1.msra.mxu0 0.0
    %190 = vmatprep.subr.mxu0 0.0
    %191 = vmatpush1.msra.mxu0 0.0
    %192 = vmatprep.subr.mxu0 0.0
    %193 = vmatpush1.msra.mxu0 0.0
    %194 = vmatprep.subr.mxu0 0.0
    %195 = vmatpush1.msra.mxu0 0.0
    %196 = vmatprep.subr.mxu0 0.0
    %197 = vmatpush1.msra.mxu0 0.0
    %198 = vmatprep.subr.mxu0 0.0
    %199 = vmatpush1.msra.mxu0 0.0
    %200 = vmatprep.subr.mxu0 0.0
    %201 = vmatpush1.msra.mxu0 0.0
    %202 = vmatprep.subr.mxu0 0.0
    %203 = vmatpush1.msra.mxu0 0.0
    %204 = vmatprep.subr.mxu0 0.0
    %205 = vmatpush1.msra.mxu0 0.0
    %206 = vmatprep.subr.mxu0 0.0
    %207 = vmatpush1.msra.mxu0 0.0
    %208 = vmatprep.subr.mxu0 0.0
    %209 = vmatpush1.msra.mxu0 0.0
    %210 = vmatprep.subr.mxu0 0.0
    %211 = vmatpush1.msra.mxu0 0.0
    %212 = vmatprep.subr.mxu0 0.0
    %213 = vmatpush1.msra.mxu0 0.0
    %214 = vmatprep.subr.mxu0 0.0
    %215 = vmatpush1.msra.mxu0 0.0
    %216 = vmatprep.subr.mxu0 0.0
    %217 = vmatpush1.msra.mxu0 0.0
    %218 = vmatprep.subr.mxu0 0.0
    %219 = vmatpush1.msra.mxu0 0.0
    %220 = vmatprep.subr.mxu0 0.0
    %221 = vmatpush1.msra.mxu0 0.0
    %222 = vmatprep.subr.mxu0 0.0
    %223 = vmatpush1.msra.mxu0 0.0
    %224 = vmatprep.subr.mxu0 0.0
    %225 = vmatpush1.msra.mxu0 0.0
    %226 = vmatprep.subr.mxu0 0.0
    %227 = vmatpush1.msra.mxu0 0.0
    %228 = vmatprep.subr.mxu0 0.0
    %229 = vmatpush1.msra.mxu0 0.0
    %230 = vmatprep.subr.mxu0 0.0
    %231 = vmatpush1.msra.mxu0 0.0
    %232 = vmatprep.subr.mxu0 0.0
    %233 = vmatpush1.msra.mxu0 0.0
    %234 = vmatprep.subr.mxu0 0.0
    %235 = vmatpush1.msra.mxu0 0.0
    %236 = vmatprep.subr.mxu0 0.0
    %237 = vmatpush1.msra.mxu0 0.0
    %238 = vmatprep.subr.mxu0 0.0
    %239 = vmatpush1.msra.mxu0 0.0
    %240 = vmatprep.mubr.f32.mxu0 0.0
    %241 = vmatmul.mubr.f32.gmra.mrb[0].mxu0 %v167
    %v242 = vpop.f32.mrb[0].mxu0
    %v243 = vadd.f32 %v157, %v242
    %v244 = vpop.f32.mrb[0].mxu0
    %245 = vmatprep.mubr.f32.mxu0 0.0
    %246 = vmatmul.mubr.f32.gmra.mrb[0].mxu0 %v170
    %v247 = vpop.f32.mrb[0].mxu0
    %v248 = vadd.f32 %v162, %v247
    %v249 = vpop.f32.mrb[0].mxu0
    %250 = vdwg.mxu0
    %v251 = vld [vmem:[%s9] sm:$0x1]
    %v253 = vlaneseq
    %v254 = vshrl.u32 %v253, 7
    %v255 = vsub.s32 0, %v254
    %v256 = vrot.slane %v251, %v255
    %v258 = vadd.f32 %v243, %v256
    %v259 = vadd.f32 %v248, %v256
    %v260 = vmax.f32 %v258, 0.0
    %v261 = vmax.f32 %v259, 0.0
    %v262 = vld [vmem:[#allocation5] sm:$0xff]
    %v263 = vld [vmem:[#allocation5 + $0x8] sm:$0xff]
    %v264 = vld [vmem:[#allocation5 + $0x10] sm:$0xff]
    %v265 = vld [vmem:[#allocation5 + $0x18] sm:$0xff]
    %v266 = vld [vmem:[#allocation5 + $0x20] sm:$0xff]
    %v267 = vld [vmem:[#allocation5 + $0x28] sm:$0xff]
    %v268 = vld [vmem:[#allocation5 + $0x30] sm:$0xff]
    %v269 = vld [vmem:[#allocation5 + $0x38] sm:$0xff]
    %v270 = vld [vmem:[#allocation5 + $0x40] sm:$0xff]
    %v271 = vld [vmem:[#allocation5 + $0x48] sm:$0xff]
    %v272 = vld [vmem:[#allocation5 + $0x50] sm:$0xff]
    %v273 = vld [vmem:[#allocation5 + $0x58] sm:$0xff]
    %v274 = vld [vmem:[#allocation5 + $0x60] sm:$0xff]
    %v275 = vld [vmem:[#allocation5 + $0x68] sm:$0xff]
    %v276 = vld [vmem:[#allocation5 + $0x70] sm:$0xff]
    %v277 = vld [vmem:[#allocation5 + $0x78] sm:$0xff]
    %v278 = vld [vmem:[%s11] sm:$0x1]
    %v280 = vlaneseq
    %v281 = vshrl.u32 %v280, 7
    %v282 = vsub.s32 0, %v281
    %v283 = vrot.slane %v278, %v282
    %285 = vmatprep.subr.mxu0 0.0
    %286 = vmatpush1.msra.mxu0 %v262
    %287 = vmatprep.subr.mxu0 0.0
    %288 = vmatpush1.msra.mxu0 %v263
    %289 = vmatprep.subr.mxu0 0.0
    %290 = vmatpush1.msra.mxu0 %v264
    %291 = vmatprep.subr.mxu0 0.0
    %292 = vmatpush1.msra.mxu0 %v265
    %293 = vmatprep.subr.mxu0 0.0
    %294 = vmatpush1.msra.mxu0 %v266
    %295 = vmatprep.subr.mxu0 0.0
    %296 = vmatpush1.msra.mxu0 %v267
    %297 = vmatprep.subr.mxu0 0.0
    %298 = vmatpush1.msra.mxu0 %v268
    %299 = vmatprep.subr.mxu0 0.0
    %300 = vmatpush1.msra.mxu0 %v269
    %301 = vmatprep.subr.mxu0 0.0
    %302 = vmatpush1.msra.mxu0 %v270
    %303 = vmatprep.subr.mxu0 0.0
    %304 = vmatpush1.msra.mxu0 %v271
    %305 = vmatprep.subr.mxu0 0.0
    %306 = vmatpush1.msra.mxu0 %v272
    %307 = vmatprep.subr.mxu0 0.0
    %308 = vmatpush1.msra.mxu0 %v273
    %309 = vmatprep.subr.mxu0 0.0
    %310 = vmatpush1.msra.mxu0 %v274
    %311 = vmatprep.subr.mxu0 0.0
    %312 = vmatpush1.msra.mxu0 %v275
    %313 = vmatprep.subr.mxu0 0.0
    %314 = vmatpush1.msra.mxu0 %v276
    %315 = vmatprep.subr.mxu0 0.0
    %316 = vmatpush1.msra.mxu0 %v277
    %317 = vmatprep.subr.mxu0 0.0
    %318 = vmatpush1.msra.mxu0 0.0
    %319 = vmatprep.subr.mxu0 0.0
    %320 = vmatpush1.msra.mxu0 0.0
    %321 = vmatprep.subr.mxu0 0.0
    %322 = vmatpush1.msra.mxu0 0.0
    %323 = vmatprep.subr.mxu0 0.0
    %324 = vmatpush1.msra.mxu0 0.0
    %325 = vmatprep.subr.mxu0 0.0
    %326 = vmatpush1.msra.mxu0 0.0
    %327 = vmatprep.subr.mxu0 0.0
    %328 = vmatpush1.msra.mxu0 0.0
    %329 = vmatprep.subr.mxu0 0.0
    %330 = vmatpush1.msra.mxu0 0.0
    %331 = vmatprep.subr.mxu0 0.0
    %332 = vmatpush1.msra.mxu0 0.0
    %333 = vmatprep.subr.mxu0 0.0
    %334 = vmatpush1.msra.mxu0 0.0
    %335 = vmatprep.subr.mxu0 0.0
    %336 = vmatpush1.msra.mxu0 0.0
    %337 = vmatprep.subr.mxu0 0.0
    %338 = vmatpush1.msra.mxu0 0.0
    %339 = vmatprep.subr.mxu0 0.0
    %340 = vmatpush1.msra.mxu0 0.0
    %341 = vmatprep.subr.mxu0 0.0
    %342 = vmatpush1.msra.mxu0 0.0
    %343 = vmatprep.subr.mxu0 0.0
    %344 = vmatpush1.msra.mxu0 0.0
    %345 = vmatprep.subr.mxu0 0.0
    %346 = vmatpush1.msra.mxu0 0.0
    %347 = vmatprep.subr.mxu0 0.0
    %348 = vmatpush1.msra.mxu0 0.0
    %349 = vmatprep.mubr.f32.mxu0 0.0
    %350 = vmatmul.mubr.f32.gmra.mrb[0].mxu0 %v260
    %v351 = vpop.f32.mrb[0].mxu0
    %v352 = vadd.f32 %v283, %v351
    %v353 = vpop.f32.mrb[0].mxu0
    %354 = vmatprep.mubr.f32.mxu0 0.0
    %355 = vmatmul.mubr.f32.gmra.mrb[0].mxu0 %v261
    %v356 = vpop.f32.mrb[0].mxu0
    %v357 = vadd.f32 %v283, %v356
    %v358 = vpop.f32.mrb[0].mxu0
    %359 = vdwg.mxu0
    %360 = vst [vmem:[#allocation8] sm:$0xff] %v352
    %361 = vst [vmem:[#allocation8 + $0x8] sm:$0xff] %v357
    %p362 = scmp.eq.s32.totalorder 0, 0
    // Predicated region
    $region58: #{tpu_custom_call.1} parent=1 // pred_check
      %p363 = pneg %p362
    $region59: #{tpu_custom_call.1} parent=1 // pred_check_branch
      %365 = sbr.rel (%p363) target = $region61
    $region60: #{tpu_custom_call.1} parent=1 // pred_region
      %v366 = vld [vmem:[%s0] sm:$0x3]
      %v367 = vld [vmem:[%s3] sm:$0xf]
      %v368 = vld [vmem:[%s4] sm:$0x1]
      %v370 = vlaneseq
      %v371 = vshrl.u32 %v370, 7
      %v372 = vsub.s32 0, %v371
      %v373 = vrot.slane %v368, %v372
      %v376 = vsel %vm79, %v366, 0
      %v379 = vsel %vm86, %v367, 0
      %381 = vmatprep.subr.mxu0 0.0
      %382 = vmatpush1.msra.mxu0 %v379
      %383 = vmatprep.subr.mxu0 0.0
      %384 = vmatpush1.msra.mxu0 0.0
      %385 = vmatprep.subr.mxu0 0.0
      %386 = vmatpush1.msra.mxu0 0.0
      %387 = vmatprep.subr.mxu0 0.0
      %388 = vmatpush1.msra.mxu0 0.0
      %389 = vmatprep.subr.mxu0 0.0
      %390 = vmatpush1.msra.mxu0 0.0
      %391 = vmatprep.subr.mxu0 0.0
      %392 = vmatpush1.msra.mxu0 0.0
      %393 = vmatprep.subr.mxu0 0.0
      %394 = vmatpush1.msra.mxu0 0.0
      %395 = vmatprep.subr.mxu0 0.0
      %396 = vmatpush1.msra.mxu0 0.0
      %397 = vmatprep.subr.mxu0 0.0
      %398 = vmatpush1.msra.mxu0 0.0
      %399 = vmatprep.subr.mxu0 0.0
      %400 = vmatpush1.msra.mxu0 0.0
      %401 = vmatprep.subr.mxu0 0.0
      %402 = vmatpush1.msra.mxu0 0.0
      %403 = vmatprep.subr.mxu0 0.0
      %404 = vmatpush1.msra.mxu0 0.0
      %405 = vmatprep.subr.mxu0 0.0
      %406 = vmatpush1.msra.mxu0 0.0
      %407 = vmatprep.subr.mxu0 0.0
      %408 = vmatpush1.msra.mxu0 0.0
      %409 = vmatprep.subr.mxu0 0.0
      %410 = vmatpush1.msra.mxu0 0.0
      %411 = vmatprep.subr.mxu0 0.0
      %412 = vmatpush1.msra.mxu0 0.0
      %413 = vmatprep.subr.mxu0 0.0
      %414 = vmatpush1.msra.mxu0 0.0
      %415 = vmatprep.subr.mxu0 0.0
      %416 = vmatpush1.msra.mxu0 0.0
      %417 = vmatprep.subr.mxu0 0.0
      %418 = vmatpush1.msra.mxu0 0.0
      %419 = vmatprep.subr.mxu0 0.0
      %420 = vmatpush1.msra.mxu0 0.0
      %421 = vmatprep.subr.mxu0 0.0
      %422 = vmatpush1.msra.mxu0 0.0
      %423 = vmatprep.subr.mxu0 0.0
      %424 = vmatpush1.msra.mxu0 0.0
      %425 = vmatprep.subr.mxu0 0.0
      %426 = vmatpush1.msra.mxu0 0.0
      %427 = vmatprep.subr.mxu0 0.0
      %428 = vmatpush1.msra.mxu0 0.0
      %429 = vmatprep.subr.mxu0 0.0
      %430 = vmatpush1.msra.mxu0 0.0
      %431 = vmatprep.subr.mxu0 0.0
      %432 = vmatpush1.msra.mxu0 0.0
      %433 = vmatprep.subr.mxu0 0.0
      %434 = vmatpush1.msra.mxu0 0.0
      %435 = vmatprep.subr.mxu0 0.0
      %436 = vmatpush1.msra.mxu0 0.0
      %437 = vmatprep.subr.mxu0 0.0
      %438 = vmatpush1.msra.mxu0 0.0
      %439 = vmatprep.subr.mxu0 0.0
      %440 = vmatpush1.msra.mxu0 0.0
      %441 = vmatprep.subr.mxu0 0.0
      %442 = vmatpush1.msra.mxu0 0.0
      %443 = vmatprep.subr.mxu0 0.0
      %444 = vmatpush1.msra.mxu0 0.0
      %445 = vmatprep.mubr.f32.mxu0 0.0
      %446 = vmatmul.mubr.f32.gmra.mrb[0].mxu0 %v376
      %v447 = vpop.f32.mrb[0].mxu0
      %v448 = vadd.f32 %v373, %v447
      %v449 = vpop.f32.mrb[0].mxu0
      %450 = vdwg.mxu0
      %v451 = vmax.f32 %v448, 0.0
      %v452 = vld [vmem:[#allocation2] sm:$0xff]
      %v453 = vld [vmem:[#allocation2 + $0x8] sm:$0xff]
      %v454 = vld [vmem:[#allocation2 + $0x10] sm:$0xff]
      %v455 = vld [vmem:[#allocation2 + $0x18] sm:$0xff]
      %v456 = vld [vmem:[#allocation2 + $0x20] sm:$0xff]
      %v457 = vld [vmem:[#allocation2 + $0x28] sm:$0xff]
      %v458 = vld [vmem:[#allocation2 + $0x30] sm:$0xff]
      %v459 = vld [vmem:[#allocation2 + $0x38] sm:$0xff]
      %v460 = vld [vmem:[#allocation2 + $0x40] sm:$0xff]
      %v461 = vld [vmem:[#allocation2 + $0x48] sm:$0xff]
      %v462 = vld [vmem:[#allocation2 + $0x50] sm:$0xff]
      %v463 = vld [vmem:[#allocation2 + $0x58] sm:$0xff]
      %v464 = vld [vmem:[#allocation2 + $0x60] sm:$0xff]
      %v465 = vld [vmem:[#allocation2 + $0x68] sm:$0xff]
      %v466 = vld [vmem:[#allocation2 + $0x70] sm:$0xff]
      %v467 = vld [vmem:[#allocation2 + $0x78] sm:$0xff]
      %v468 = vld [vmem:[%s6] sm:$0x1]
      %v470 = vlaneseq
      %v471 = vshrl.u32 %v470, 7
      %v472 = vsub.s32 0, %v471
      %v473 = vrot.slane %v468, %v472
      %475 = vmatprep.subr.mxu0 0.0
      %476 = vmatpush1.msra.mxu0 %v452
      %477 = vmatprep.subr.mxu0 0.0
      %478 = vmatpush1.msra.mxu0 %v453
      %479 = vmatprep.subr.mxu0 0.0
      %480 = vmatpush1.msra.mxu0 %v454
      %481 = vmatprep.subr.mxu0 0.0
      %482 = vmatpush1.msra.mxu0 %v455
      %483 = vmatprep.subr.mxu0 0.0
      %484 = vmatpush1.msra.mxu0 %v456
      %485 = vmatprep.subr.mxu0 0.0
      %486 = vmatpush1.msra.mxu0 %v457
      %487 = vmatprep.subr.mxu0 0.0
      %488 = vmatpush1.msra.mxu0 %v458
      %489 = vmatprep.subr.mxu0 0.0
      %490 = vmatpush1.msra.mxu0 %v459
      %491 = vmatprep.subr.mxu0 0.0
      %492 = vmatpush1.msra.mxu0 %v460
      %493 = vmatprep.subr.mxu0 0.0
      %494 = vmatpush1.msra.mxu0 %v461
      %495 = vmatprep.subr.mxu0 0.0
      %496 = vmatpush1.msra.mxu0 %v462
      %497 = vmatprep.subr.mxu0 0.0
      %498 = vmatpush1.msra.mxu0 %v463
      %499 = vmatprep.subr.mxu0 0.0
      %500 = vmatpush1.msra.mxu0 %v464
      %501 = vmatprep.subr.mxu0 0.0
      %502 = vmatpush1.msra.mxu0 %v465
      %503 = vmatprep.subr.mxu0 0.0
      %504 = vmatpush1.msra.mxu0 %v466
      %505 = vmatprep.subr.mxu0 0.0
      %506 = vmatpush1.msra.mxu0 %v467
      %507 = vmatprep.subr.mxu0 0.0
      %508 = vmatpush1.msra.mxu0 0.0
      %509 = vmatprep.subr.mxu0 0.0
      %510 = vmatpush1.msra.mxu0 0.0
      %511 = vmatprep.subr.mxu0 0.0
      %512 = vmatpush1.msra.mxu0 0.0
      %513 = vmatprep.subr.mxu0 0.0
      %514 = vmatpush1.msra.mxu0 0.0
      %515 = vmatprep.subr.mxu0 0.0
      %516 = vmatpush1.msra.mxu0 0.0
      %517 = vmatprep.subr.mxu0 0.0
      %518 = vmatpush1.msra.mxu0 0.0
      %519 = vmatprep.subr.mxu0 0.0
      %520 = vmatpush1.msra.mxu0 0.0
      %521 = vmatprep.subr.mxu0 0.0
      %522 = vmatpush1.msra.mxu0 0.0
      %523 = vmatprep.subr.mxu0 0.0
      %524 = vmatpush1.msra.mxu0 0.0
      %525 = vmatprep.subr.mxu0 0.0
      %526 = vmatpush1.msra.mxu0 0.0
      %527 = vmatprep.subr.mxu0 0.0
      %528 = vmatpush1.msra.mxu0 0.0
      %529 = vmatprep.subr.mxu0 0.0
      %530 = vmatpush1.msra.mxu0 0.0
      %531 = vmatprep.subr.mxu0 0.0
      %532 = vmatpush1.msra.mxu0 0.0
      %533 = vmatprep.subr.mxu0 0.0
      %534 = vmatpush1.msra.mxu0 0.0
      %535 = vmatprep.subr.mxu0 0.0
      %536 = vmatpush1.msra.mxu0 0.0
      %537 = vmatprep.subr.mxu0 0.0
      %538 = vmatpush1.msra.mxu0 0.0
      %539 = vmatprep.mubr.f32.mxu0 0.0
      %540 = vmatmul.mubr.f32.gmra.mrb[0].mxu0 %v451
      %v541 = vpop.f32.mrb[0].mxu0
      %v542 = vadd.f32 %v473, %v541
      %v543 = vpop.f32.mrb[0].mxu0
      %544 = vdwg.mxu0
      %545 = vst [vmem:[#allocation7] sm:$0x3] %v542
    $region61: #{tpu_custom_call.1} parent=1 // pred_fallthru
      _
    // Predicated region
    $region62: #{tpu_custom_call.1} parent=1 // pred_check
      _
    $region63: #{tpu_custom_call.1} parent=1 // pred_check_branch
      %547 = sbr.rel (0) target = $region65
    $region64: #{tpu_custom_call.1} parent=1 // pred_region
      %s549 = ssub.s32 32, 32
      %550 = vsyncadd [#allocation4], %s549
      %s552 = sshll.u32 [#allocation7], 4
      %s553 = int_to_ptr.vmem [resolvable:$true] %s552
      %555 = dma.vmem_to_hbm [thread:$0]  %s553, 32, %s12, [#allocation4]
    $region65: #{tpu_custom_call.1} parent=1 // pred_fallthru
      _
    // Predicated region
    $region66: #{tpu_custom_call.1} parent=1 // pred_check
      _
    $region67: #{tpu_custom_call.1} parent=1 // pred_check_branch
      %557 = sbr.rel (0) target = $region69
    $region68: #{tpu_custom_call.1} parent=1 // pred_region
      %s559 = ssub.s32 256, 256
      %560 = vsyncadd [#allocation9], %s559
      %s561 = sshll.u32 [#allocation8], 4
      %s562 = int_to_ptr.vmem [resolvable:$true] %s561
      %567 = dma.vmem_to_hbm [thread:$0]  %s562, 256, %s13, [#allocation9], 128, 128, 8
    $region69: #{tpu_custom_call.1} parent=1 // pred_fallthru
      _
    // Predicated region
    $region70: #{tpu_custom_call.1} parent=1 // pred_check
      _
    $region71: #{tpu_custom_call.1} parent=1 // pred_check_branch
      %569 = sbr.rel (0) target = $region73
    $region72: #{tpu_custom_call.1} parent=1 // pred_region
      %570 = dma.done [#allocation4], 32
    $region73: #{tpu_custom_call.1} parent=1 // pred_fallthru
      _
    // Predicated region
    $region74: #{tpu_custom_call.1} parent=1 // pred_check
      _
    $region75: #{tpu_custom_call.1} parent=1 // pred_check_branch
      %572 = sbr.rel (0) target = $region77
    $region76: #{tpu_custom_call.1} parent=1 // pred_region
      %573 = dma.done [#allocation9], 256
    $region77: #{tpu_custom_call.1} parent=1 // pred_fallthru
      _
    %574 = vsyncpa [#allocation3], 1
    %575 = vsyncpa [#allocation6], 1
    %576 = vsyncpa [#allocation4], 1
    %577 = vsyncpa [#allocation9], 1

</llo_original>
